<compile_context>
chip_gen: v7x
topology: tpu7x:2x2x1
jax: 0.10.0
libtpu: 0.0.40
codegen_flags: <defaults>
</compile_context>

<pallas_src>
import jax
import jax.numpy as jnp
from jax.experimental import pallas as pl
from jax.experimental.pallas import tpu as pltpu

INPUT_DIM = 256
HIDDEN_DIM = 128
OUTPUT_DIM = 64


def _round_up(x, m):
    return (x + m - 1) // m * m


def _dec_kernel(x_ref, w1_ref, b1_ref, w2_ref, b2e_ref, num_ref):
    x = x_ref[...]                                                     # [TM, 256] f32
    # Linear -> ReLU (f32 on the MXU; kernel is HBM-bound so this is free).
    h = jnp.dot(x, w1_ref[...], preferred_element_type=jnp.float32) + b1_ref[...]
    h = jnp.maximum(h, 0.0)                                            # [TM, 128]
    # Second Linear with the folded center bias: diff == z - encoder(center).
    diff = jnp.dot(h, w2_ref[...], preferred_element_type=jnp.float32) + b2e_ref[...]
    norm_sq = jnp.sum(diff * diff, axis=1)                             # [TM]
    # EUP reciprocal (otherwise idle slot); emit the UN-normalized numerator
    # as a lane-dense (1, 1, TM) row.
    numerator = pl.reciprocal(1.0 + norm_sq, approx=True)
    num_ref[...] = numerator.reshape(num_ref.shape)


def dec_forward(x, ori_centers, w1, b1, w2, b2, *, tm=2048):
    """DEC forward pass.

    x:           [N, 256] f32 batch
    ori_centers: [1, 256] f32 (ori_cluster_centers; encoder(ori_centers) is
                 the cluster center, as set by DEC.update())
    w1, b1:      [256, 128], [1, 128]   (first Linear, weight pre-transposed)
    w2, b2:      [128, 64],  [1, 64]    (second Linear, weight pre-transposed)
    returns:     [N] f32 soft assignment, sums to 1.
    """
    n = x.shape[0]

    # --- row-tile selection -------------------------------------------------
    tm = _round_up(max(1, tm), 8)
    if n >= 256:
        # Keep at least 2 grid steps on moderate/large batches so the
        # "parallel" row axis can shard across the two TensorCores on v7x.
        tm = min(tm, _round_up(pl.cdiv(n, 2), 8))
    if tm >= n:
        tm = n                      # single full-extent row block (always valid)
    num_tiles = pl.cdiv(n, tm)      # last tile may be ragged (over-read, sliced off)

    # --- fold encoder(ori_cluster_centers) into the second-layer bias --------
    hc = jnp.maximum(ori_centers @ w1 + b1, 0.0)
    zc = hc @ w2 + b2                                   # [1, 64] = cluster center
    b2_eff = (b2 - zc).astype(jnp.float32)              # [1, 64]

    x = x.astype(jnp.float32)
    w1 = w1.astype(jnp.float32)
    b1 = b1.astype(jnp.float32)
    w2 = w2.astype(jnp.float32)

    flops = 2 * n * (INPUT_DIM * HIDDEN_DIM + HIDDEN_DIM * OUTPUT_DIM)
    bytes_accessed = (
        n * INPUT_DIM * 4                                      # x (f32)
        + (INPUT_DIM * HIDDEN_DIM + HIDDEN_DIM * OUTPUT_DIM) * 4  # weights (f32)
        + (HIDDEN_DIM + OUTPUT_DIM) * 4                        # biases (f32)
        + num_tiles * tm * 4                                   # output (f32)
    )

    num = pl.pallas_call(
        _dec_kernel,
        out_shape=jax.ShapeDtypeStruct((num_tiles, 1, tm), jnp.float32),
        grid=(num_tiles,),
        in_specs=[
            pl.BlockSpec((tm, INPUT_DIM), lambda i: (i, 0)),            # x: streamed
            pl.BlockSpec((INPUT_DIM, HIDDEN_DIM), lambda i: (0, 0)),    # w1: resident
            pl.BlockSpec((1, HIDDEN_DIM), lambda i: (0, 0)),            # b1: resident
            pl.BlockSpec((HIDDEN_DIM, OUTPUT_DIM), lambda i: (0, 0)),   # w2: resident
            pl.BlockSpec((1, OUTPUT_DIM), lambda i: (0, 0)),            # b2_eff: resident
        ],
        out_specs=pl.BlockSpec((1, 1, tm), lambda i: (i, 0, 0)),        # lane-dense
        compiler_params=pltpu.CompilerParams(
            dimension_semantics=("parallel",),
            vmem_limit_bytes=32 * 1024 * 1024,
        ),
        cost_estimate=pl.CostEstimate(
            flops=flops, transcendentals=n, bytes_accessed=bytes_accessed),
    )(x, w1, b1, w2, b2_eff)

    # Global normalization (whole-batch reduction) in the wrapper.
    numerator = num.reshape(-1)[:n]
    return numerator / jnp.sum(numerator)


def _reference(x, c, w1, b1, w2, b2):
    enc = lambda t: jnp.maximum(t @ w1 + b1, 0.0) @ w2 + b2
    z = enc(x)
    zc = enc(c)
    ns = jnp.sum((z - zc) ** 2, axis=1)
    num = 1.0 / (1.0 + ns)
    return num / jnp.sum(num)


if __name__ == "__main__":
    key = jax.random.PRNGKey(0)
    kx, kc, k1, k2, k3, k4 = jax.random.split(key, 6)

    # Deterministic parameter init (uniform, PyTorch-Linear-like scale).
    w1 = jax.random.uniform(k1, (INPUT_DIM, HIDDEN_DIM), jnp.float32,
                            -1.0 / INPUT_DIM ** 0.5, 1.0 / INPUT_DIM ** 0.5)
    b1 = jax.random.uniform(k2, (1, HIDDEN_DIM), jnp.float32,
                            -1.0 / INPUT_DIM ** 0.5, 1.0 / INPUT_DIM ** 0.5)
    w2 = jax.random.uniform(k3, (HIDDEN_DIM, OUTPUT_DIM), jnp.float32,
                            -1.0 / HIDDEN_DIM ** 0.5, 1.0 / HIDDEN_DIM ** 0.5)
    b2 = jax.random.uniform(k4, (1, OUTPUT_DIM), jnp.float32,
                            -1.0 / HIDDEN_DIM ** 0.5, 1.0 / HIDDEN_DIM ** 0.5)
    ori_centers = jax.random.normal(kc, (1, INPUT_DIM), dtype=jnp.float32)

    # Case 1: batch divisible by the tile (2-step row grid, full tiles).
    N1 = 16
    x1 = jax.random.normal(kx, (N1, INPUT_DIM), dtype=jnp.float32)
    q1 = dec_forward(x1, ori_centers, w1, b1, w2, b2, tm=8)
    jax.block_until_ready(q1)
    q1_ref = _reference(x1, ori_centers, w1, b1, w2, b2)
    assert q1.shape == (N1,)
    assert jnp.allclose(q1, q1_ref, rtol=1e-2, atol=1e-6)
    assert jnp.allclose(jnp.sum(q1), 1.0, rtol=1e-5, atol=1e-5)

    # Case 2: batch not divisible by the tile (ragged last tile, over-read + slice).
    N2 = 13
    x2 = x1[:N2]
    q2 = dec_forward(x2, ori_centers, w1, b1, w2, b2, tm=8)
    jax.block_until_ready(q2)
    q2_ref = _reference(x2, ori_centers, w1, b1, w2, b2)
    assert q2.shape == (N2,)
    assert jnp.allclose(q2, q2_ref, rtol=1e-2, atol=1e-6)
    assert jnp.allclose(jnp.sum(q2), 1.0, rtol=1e-5, atol=1e-5)

    # Case 3: default tile on a moderate batch (exercises the >=2-step cap for
    # v7x dual-TC sharding plus a ragged last tile).
    N3 = 300
    x3 = jax.random.normal(jax.random.PRNGKey(3), (N3, INPUT_DIM), dtype=jnp.float32)
    q3 = dec_forward(x3, ori_centers, w1, b1, w2, b2)
    jax.block_until_ready(q3)
    q3_ref = _reference(x3, ori_centers, w1, b1, w2, b2)
    assert q3.shape == (N3,)
    assert jnp.allclose(q3, q3_ref, rtol=1e-2, atol=1e-6)
    assert jnp.allclose(jnp.sum(q3), 1.0, rtol=1e-5, atol=1e-5)

    print("KERNEL_OK")
</pallas_src>

<mosaic_0001>
module attributes {stable_mosaic.version = 11 : i64} {
  func.func @_dec_kernel(%arg0: i32, %arg1: memref<8x256xf32, #tpu.memory_space<vmem>>, %arg2: memref<256x128xf32, #tpu.memory_space<vmem>>, %arg3: memref<1x128xf32, #tpu.memory_space<vmem>>, %arg4: memref<128x64xf32, #tpu.memory_space<vmem>>, %arg5: memref<1x64xf32, #tpu.memory_space<vmem>>, %arg6: memref<1x1x8xf32, #tpu.memory_space<vmem>>) attributes {dimension_semantics = [#tpu.dimension_semantics<parallel>], iteration_bounds = array<i64: 2>, scalar_prefetch = 0 : i64, scratch_operands = 0 : i64, tpu.core_type = #tpu.core_type<tc>, window_params = [{transform_indices = @transform_0, window_bounds = array<i64: 8, 256>}, {pipeline_mode = #tpu.pipeline_mode<synchronous>, transform_indices = @transform_1, window_bounds = array<i64: 256, 128>}, {pipeline_mode = #tpu.pipeline_mode<synchronous>, transform_indices = @transform_2, window_bounds = array<i64: 1, 128>}, {pipeline_mode = #tpu.pipeline_mode<synchronous>, transform_indices = @transform_3, window_bounds = array<i64: 128, 64>}, {pipeline_mode = #tpu.pipeline_mode<synchronous>, transform_indices = @transform_4, window_bounds = array<i64: 1, 64>}, {transform_indices = @transform_5, window_bounds = array<i64: 1, 1, 8>}]} {
    %c0 = arith.constant 0 : index
    %c0_0 = arith.constant 0 : index
    %0 = vector.load %arg1[%c0, %c0_0] : memref<8x256xf32, #tpu.memory_space<vmem>>, vector<8x256xf32>
    %c0_1 = arith.constant 0 : index
    %c0_2 = arith.constant 0 : index
    %1 = vector.load %arg2[%c0_1, %c0_2] : memref<256x128xf32, #tpu.memory_space<vmem>>, vector<256x128xf32>
    %cst = arith.constant dense<0.000000e+00> : vector<8x128xf32>
    %2 = tpu.matmul %0, %1, %cst {dimension_numbers = #tpu.dot_dimension_numbers<[1], [0], [0], [1], [0, 0, 1, 1], [], []>} : vector<8x256xf32>, vector<256x128xf32>, vector<8x128xf32> -> vector<8x128xf32>
    %c0_3 = arith.constant 0 : index
    %c0_4 = arith.constant 0 : index
    %3 = vector.load %arg3[%c0_3, %c0_4] : memref<1x128xf32, #tpu.memory_space<vmem>>, vector<1x128xf32>
    %4 = vector.broadcast %3 : vector<1x128xf32> to vector<8x128xf32>
    %5 = arith.addf %2, %4 : vector<8x128xf32>
    %cst_5 = arith.constant 0.000000e+00 : f32
    %6 = vector.broadcast %cst_5 : f32 to vector<8x128xf32>
    %7 = arith.maximumf %5, %6 : vector<8x128xf32>
    %c0_6 = arith.constant 0 : index
    %c0_7 = arith.constant 0 : index
    %8 = vector.load %arg4[%c0_6, %c0_7] : memref<128x64xf32, #tpu.memory_space<vmem>>, vector<128x64xf32>
    %cst_8 = arith.constant dense<0.000000e+00> : vector<8x64xf32>
    %9 = tpu.matmul %7, %8, %cst_8 {dimension_numbers = #tpu.dot_dimension_numbers<[1], [0], [0], [1], [0, 0, 1, 1], [], []>} : vector<8x128xf32>, vector<128x64xf32>, vector<8x64xf32> -> vector<8x64xf32>
    %c0_9 = arith.constant 0 : index
    %c0_10 = arith.constant 0 : index
    %10 = vector.load %arg5[%c0_9, %c0_10] : memref<1x64xf32, #tpu.memory_space<vmem>>, vector<1x64xf32>
    %11 = vector.broadcast %10 : vector<1x64xf32> to vector<8x64xf32>
    %12 = arith.addf %9, %11 : vector<8x64xf32>
    %13 = arith.mulf %12, %12 : vector<8x64xf32>
    %cst_11 = arith.constant dense<0.000000e+00> : vector<8xf32>
    %14 = vector.multi_reduction <add>, %13, %cst_11 [1] : vector<8x64xf32> to vector<8xf32>
    %cst_12 = arith.constant 1.000000e+00 : f32
    %15 = vector.broadcast %cst_12 : f32 to vector<8xf32>
    %16 = arith.addf %15, %14 : vector<8xf32>
    %17 = tpu.reciprocal %16 {approx = true} : vector<8xf32> -> vector<8xf32>
    %18 = vector.shape_cast %17 : vector<8xf32> to vector<1x1x8xf32>
    %c0_13 = arith.constant 0 : index
    %c0_14 = arith.constant 0 : index
    %c0_15 = arith.constant 0 : index
    %19 = vector.load %arg6[%c0_13, %c0_14, %c0_15] : memref<1x1x8xf32, #tpu.memory_space<vmem>>, vector<1x1x8xf32>
    tpu.vector_store %arg6[%c0_13, %c0_14, %c0_15], %18 {strides = array<i32>} : memref<1x1x8xf32, #tpu.memory_space<vmem>>, vector<1x1x8xf32>,
    return
  }
  func.func @transform_0(%arg0: i32) -> (i32, i32) {
    %c0_i32 = arith.constant 0 : i32
    %c0_i32_0 = arith.constant 0 : i32
    return %arg0, %c0_i32 : i32, i32
  }
  func.func @transform_1(%arg0: i32) -> (i32, i32) {
    %c0_i32 = arith.constant 0 : i32
    %c0_i32_0 = arith.constant 0 : i32
    %c0_i32_1 = arith.constant 0 : i32
    return %c0_i32, %c0_i32_0 : i32, i32
  }
  func.func @transform_2(%arg0: i32) -> (i32, i32) {
    %c0_i32 = arith.constant 0 : i32
    %c0_i32_0 = arith.constant 0 : i32
    %c0_i32_1 = arith.constant 0 : i32
    return %c0_i32, %c0_i32_0 : i32, i32
  }
  func.func @transform_3(%arg0: i32) -> (i32, i32) {
    %c0_i32 = arith.constant 0 : i32
    %c0_i32_0 = arith.constant 0 : i32
    %c0_i32_1 = arith.constant 0 : i32
    return %c0_i32, %c0_i32_0 : i32, i32
  }
  func.func @transform_4(%arg0: i32) -> (i32, i32) {
    %c0_i32 = arith.constant 0 : i32
    %c0_i32_0 = arith.constant 0 : i32
    %c0_i32_1 = arith.constant 0 : i32
    return %c0_i32, %c0_i32_0 : i32, i32
  }
  func.func @transform_5(%arg0: i32) -> (i32, i32, i32) {
    %c0_i32 = arith.constant 0 : i32
    %c0_i32_0 = arith.constant 0 : i32
    %c0_i32_1 = arith.constant 0 : i32
    return %arg0, %c0_i32, %c0_i32_0 : i32, i32, i32
  }
}

</mosaic_0001>

<llo_original>
// kernel: tpu_custom_call.1
$region0: #{tpu_custom_call.1}
  #allocation0 [shape = 'u32[]', space=smem, size = 0x4, offset = 0x4, fixed_abs, tag = 'smem constant byte address 0x4 - core index']
  #allocation1 [shape = 'u32[144,128]{1,0:T(1,128)}', space=vmem, size = 0x12000, scoped, tag = 'internal scratch']
  %s0 = inlined_call_operand.vmem [shape: f32[16,256], index: 0, kind: input, shape index: {}]
  %s1 = inlined_call_operand.hbm [shape: f32[256,128], index: 1, kind: input, shape index: {}]
  %s2 = inlined_call_operand.vmem [shape: f32[1,128], index: 2, kind: input, shape index: {}]
  %s3 = inlined_call_operand.vmem [shape: f32[128,64], index: 3, kind: input, shape index: {}]
  %s4 = inlined_call_operand.vmem [shape: f32[1,64], index: 4, kind: input, shape index: {}]
  %s5 = inlined_call_operand.hbm [shape: f32[2,1,8], index: 5, kind: output, shape index: {}]
  %s6 = sld [smem:[#allocation0]]
  $region57: #{tpu_custom_call.1} parent=0
    _
  %s8 = ssub.s32 1, %s6
  %s9 = scalar_select 0, %s8, %s6
  $region1: #{tpu_custom_call.1} parent=0
    #allocation2 [shape = 'u8[131072]{0}', space=vmem, size = 0x20000, scoped, tag = 'input window, operand 1, single buffered']
    #allocation3 [shape = 's32[2]{0}', space=sflag, size = 0x8, scoped, tag = 'scoped memory for tpu_custom_call.1']
    #allocation4 [shape = 's32[2]{0}', space=sflag, size = 0x8, scoped, tag = 'scoped memory for tpu_custom_call.1']
    #allocation5 [shape = 'u8[1024]{0}', space=vmem, size = 0x400, scoped, tag = 'output window, operand 0']
    %10 = vsyncpa [#allocation3], 0
    %11 = vsyncpa [#allocation4], 0
    %s12 = scalar_lea.sflag [#allocation4], 1
    %13 = vsyncpa %s12, 0
    loop: start=0, step=1, limit=4
    $region2: #{tpu_custom_call.1} parent=1 // loop_pre_header
      _
    $region3: #{tpu_custom_call.1} parent=1 // loop_header
      %s15 = sphi 0, %s19
      %p16 = scmp.ge.s32.totalorder %s15, 4
      %s25 = sphi 0, %s27
      %s28 = sphi 0, %s25
      %s29 = sphi 0, %s28
      %s45 = sphi 0, %s29
      %s49 = sphi 0, %s49
      %s51 = sphi 0, %s49
      %s52 = sphi 0, %s51
      %s66 = sphi 0, %s52
      %s70 = sphi 0, %s70
      %s72 = sphi 0, %s70
      %s73 = sphi 0, %s72
      %s87 = sphi 0, %s73
      %s91 = sphi 0, %s91
      %s93 = sphi 0, %s91
      %s94 = sphi 0, %s93
      %s108 = sphi 0, %s94
      %s112 = sphi 0, %s112
      %s114 = sphi 0, %s112
      %s115 = sphi 0, %s114
      %s129 = sphi 0, %s115
      %s135 = sphi 0, %s137
      %s138 = sphi 0, %s135
      %s139 = sphi 0, %s138
      %s155 = sphi 0, %s139
    $region4: #{tpu_custom_call.1} parent=1 // loop_header_branch
      %18 = sbr.rel (%p16) target = $region8
    $region5: #{tpu_custom_call.1} parent=1 // loop_body
      %s20 = ssub.s32 %s15, 1
      %s21 = ssub.s32 %s15, 2
      %s22 = sadd.s32 %s15, 1
      %s23 = ssub.s32 %s15, %s22
      %p24 = scmp.eq.s32.totalorder %s23, 0
      %s26 = sadd.s32 %s25, 1
      %s27 = scalar_select %p24, %s25, %s26
      %p30 = pneg %p24
      %p31 = scmp.eq.s32.totalorder %s15, 1
      %p32 = por %p30, %p31
      %p33 = scmp.ne.s32.totalorder %s25, %s28
      %p34 = scmp.eq.s32.totalorder %s15, 0
      %p35 = por %p33, %p34
      %p36 = scmp.ne.s32.totalorder %s25, %s28
      %p37 = scmp.eq.s32.totalorder %s20, 1
      %p38 = por %p36, %p37
      %p39 = scmp.ne.s32.totalorder %s28, %s29
      %p40 = scmp.eq.s32.totalorder %s20, 0
      %p41 = por %p39, %p40
      %p42 = scmp.ne.s32.totalorder %s28, %s29
      %p43 = scmp.eq.s32.totalorder %s21, 1
      %p44 = por %p42, %p43
      %p46 = scmp.ne.s32.totalorder %s29, %s45
      %p47 = scmp.eq.s32.totalorder %s21, 0
      %p48 = por %p46, %p47
      %s50 = sadd.s32 %s49, 1
      %p53 = scmp.eq.s32.totalorder %s15, 1
      %p54 = scmp.ne.s32.totalorder %s49, %s51
      %p55 = scmp.eq.s32.totalorder %s15, 0
      %p56 = por %p54, %p55
      %p57 = scmp.ne.s32.totalorder %s49, %s51
      %p58 = scmp.eq.s32.totalorder %s20, 1
      %p59 = por %p57, %p58
      %p60 = scmp.ne.s32.totalorder %s51, %s52
      %p61 = scmp.eq.s32.totalorder %s20, 0
      %p62 = por %p60, %p61
      %p63 = scmp.ne.s32.totalorder %s51, %s52
      %p64 = scmp.eq.s32.totalorder %s21, 1
      %p65 = por %p63, %p64
      %p67 = scmp.ne.s32.totalorder %s52, %s66
      %p68 = scmp.eq.s32.totalorder %s21, 0
      %p69 = por %p67, %p68
      %s71 = sadd.s32 %s70, 1
      %p74 = scmp.eq.s32.totalorder %s15, 1
      %p75 = scmp.ne.s32.totalorder %s70, %s72
      %p76 = scmp.eq.s32.totalorder %s15, 0
      %p77 = por %p75, %p76
      %p78 = scmp.ne.s32.totalorder %s70, %s72
      %p79 = scmp.eq.s32.totalorder %s20, 1
      %p80 = por %p78, %p79
      %p81 = scmp.ne.s32.totalorder %s72, %s73
      %p82 = scmp.eq.s32.totalorder %s20, 0
      %p83 = por %p81, %p82
      %p84 = scmp.ne.s32.totalorder %s72, %s73
      %p85 = scmp.eq.s32.totalorder %s21, 1
      %p86 = por %p84, %p85
      %p88 = scmp.ne.s32.totalorder %s73, %s87
      %p89 = scmp.eq.s32.totalorder %s21, 0
      %p90 = por %p88, %p89
      %s92 = sadd.s32 %s91, 1
      %p95 = scmp.eq.s32.totalorder %s15, 1
      %p96 = scmp.ne.s32.totalorder %s91, %s93
      %p97 = scmp.eq.s32.totalorder %s15, 0
      %p98 = por %p96, %p97
      %p99 = scmp.ne.s32.totalorder %s91, %s93
      %p100 = scmp.eq.s32.totalorder %s20, 1
      %p101 = por %p99, %p100
      %p102 = scmp.ne.s32.totalorder %s93, %s94
      %p103 = scmp.eq.s32.totalorder %s20, 0
      %p104 = por %p102, %p103
      %p105 = scmp.ne.s32.totalorder %s93, %s94
      %p106 = scmp.eq.s32.totalorder %s21, 1
      %p107 = por %p105, %p106
      %p109 = scmp.ne.s32.totalorder %s94, %s108
      %p110 = scmp.eq.s32.totalorder %s21, 0
      %p111 = por %p109, %p110
      %s113 = sadd.s32 %s112, 1
      %p116 = scmp.eq.s32.totalorder %s15, 1
      %p117 = scmp.ne.s32.totalorder %s112, %s114
      %p118 = scmp.eq.s32.totalorder %s15, 0
      %p119 = por %p117, %p118
      %p120 = scmp.ne.s32.totalorder %s112, %s114
      %p121 = scmp.eq.s32.totalorder %s20, 1
      %p122 = por %p120, %p121
      %p123 = scmp.ne.s32.totalorder %s114, %s115
      %p124 = scmp.eq.s32.totalorder %s20, 0
      %p125 = por %p123, %p124
      %p126 = scmp.ne.s32.totalorder %s114, %s115
      %p127 = scmp.eq.s32.totalorder %s21, 1
      %p128 = por %p126, %p127
      %p130 = scmp.ne.s32.totalorder %s115, %s129
      %p131 = scmp.eq.s32.totalorder %s21, 0
      %p132 = por %p130, %p131
      %s133 = ssub.s32 %s15, %s22
      %p134 = scmp.eq.s32.totalorder %s133, 0
      %s136 = sadd.s32 %s135, 1
      %s137 = scalar_select %p134, %s135, %s136
      %p140 = pneg %p134
      %p141 = scmp.eq.s32.totalorder %s15, 1
      %p142 = por %p140, %p141
      %p143 = scmp.ne.s32.totalorder %s135, %s138
      %p144 = scmp.eq.s32.totalorder %s15, 0
      %p145 = por %p143, %p144
      %p146 = scmp.ne.s32.totalorder %s135, %s138
      %p147 = scmp.eq.s32.totalorder %s20, 1
      %p148 = por %p146, %p147
      %p149 = scmp.ne.s32.totalorder %s138, %s139
      %p150 = scmp.eq.s32.totalorder %s20, 0
      %p151 = por %p149, %p150
      %p152 = scmp.ne.s32.totalorder %s138, %s139
      %p153 = scmp.eq.s32.totalorder %s21, 1
      %p154 = por %p152, %p153
      %p156 = scmp.ne.s32.totalorder %s139, %s155
      %p157 = scmp.eq.s32.totalorder %s21, 0
      %p158 = por %p156, %p157
      %p159 = scmp.le.s32.totalorder 1, %s15
      %p160 = scmp.lt.s32.totalorder %s15, 3
      %p161 = pnand %p159, %p160
      %p162 = pneg %p161
      // Predicated region
      $region9: #{tpu_custom_call.1} parent=5 // pred_check
        _
      $region10: #{tpu_custom_call.1} parent=5 // pred_check_branch
        %164 = sbr.rel (%p161) target = $region12
      $region11: #{tpu_custom_call.1} parent=5 // pred_region
        %s165 = ssub.s32 %s15, 1
        // Predicated region
        $region13: #{tpu_custom_call.1} parent=11 // pred_check
          %p166 = pneg %p62
        $region14: #{tpu_custom_call.1} parent=11 // pred_check_branch
          %168 = sbr.rel (%p166) target = $region16
        $region15: #{tpu_custom_call.1} parent=11 // pred_region
          %s170 = ssub.s32 4096, 4096
          %171 = vsyncadd [#allocation3], %s170
          %s172 = sshll.u32 [#allocation2], 4
          %s173 = int_to_ptr.vmem [resolvable:$true] %s172
          %178 = dma.hbm_to_vmem [thread:$0]  %s1, 4096, %s173, [#allocation3], 128, 128, 8
        $region16: #{tpu_custom_call.1} parent=11 // pred_fallthru
          _
        // Predicated region
        $region17: #{tpu_custom_call.1} parent=11 // pred_check
          %p179 = pneg %p83
        $region18: #{tpu_custom_call.1} parent=11 // pred_check_branch
          %181 = sbr.rel (%p179) target = $region20
        $region19: #{tpu_custom_call.1} parent=11 // pred_region
          _
        $region20: #{tpu_custom_call.1} parent=11 // pred_fallthru
          _
        // Predicated region
        $region21: #{tpu_custom_call.1} parent=11 // pred_check
          %p182 = pneg %p104
        $region22: #{tpu_custom_call.1} parent=11 // pred_check_branch
          %184 = sbr.rel (%p182) target = $region24
        $region23: #{tpu_custom_call.1} parent=11 // pred_region
          _
        $region24: #{tpu_custom_call.1} parent=11 // pred_fallthru
          _
        // Predicated region
        $region25: #{tpu_custom_call.1} parent=11 // pred_check
          %p185 = pneg %p125
        $region26: #{tpu_custom_call.1} parent=11 // pred_check_branch
          %187 = sbr.rel (%p185) target = $region28
        $region27: #{tpu_custom_call.1} parent=11 // pred_region
          _
        $region28: #{tpu_custom_call.1} parent=11 // pred_fallthru
          _
      $region12: #{tpu_custom_call.1} parent=5 // pred_fallthru
        _
      %p188 = scmp.lt.s32.totalorder %s15, 2
      // Predicated region
      $region29: #{tpu_custom_call.1} parent=5 // pred_check
        %p189 = pneg %p188
      $region30: #{tpu_custom_call.1} parent=5 // pred_check_branch
        %191 = sbr.rel (%p189) target = $region32
      $region31: #{tpu_custom_call.1} parent=5 // pred_region
        // Predicated region
        $region33: #{tpu_custom_call.1} parent=31 // pred_check
          %p192 = pneg %p35
        $region34: #{tpu_custom_call.1} parent=31 // pred_check_branch
          %194 = sbr.rel (%p192) target = $region36
        $region35: #{tpu_custom_call.1} parent=31 // pred_region
          %p195 = scmp.lt.s32.totalorder %s15, 1
          %s196 = scalar_select %p195, %s15, 1
          %s197 = smul.addr %s196, 2
          %s198 = smul.addr %s197, 8
          %s199 = scalar_lea.vmem %s0, %s198
        $region36: #{tpu_custom_call.1} parent=31 // pred_fallthru
          _
      $region32: #{tpu_custom_call.1} parent=5 // pred_fallthru
        _
      %p200 = scmp.le.s32.totalorder 1, %s15
      %p201 = scmp.lt.s32.totalorder %s15, 3
      %p202 = pnand %p200, %p201
      %p203 = pneg %p202
      // Predicated region
      $region37: #{tpu_custom_call.1} parent=5 // pred_check
        _
      $region38: #{tpu_custom_call.1} parent=5 // pred_check_branch
        %205 = sbr.rel (%p202) target = $region40
      $region39: #{tpu_custom_call.1} parent=5 // pred_region
        %s206 = ssub.s32 %s15, 1
        // Predicated region
        $region41: #{tpu_custom_call.1} parent=39 // pred_check
          %p207 = pneg %p62
        $region42: #{tpu_custom_call.1} parent=39 // pred_check_branch
          %209 = sbr.rel (%p207) target = $region44
        $region43: #{tpu_custom_call.1} parent=39 // pred_region
          %210 = dma.done [#allocation3], 4096
        $region44: #{tpu_custom_call.1} parent=39 // pred_fallthru
          _
        %p211 = scmp.lt.s32.totalorder %s20, 1
        %s212 = scalar_select %p211, %s20, 1
        %s213 = smul.addr %s212, 2
        %s214 = smul.addr %s213, 8
        %s215 = scalar_lea.vmem %s0, %s214
        %p216 = pneg %p41
        %p217 = pneg %p38
        %p218 = pneg %p62
        %p219 = pneg %p59
        %p220 = pneg %p83
        %p221 = pneg %p80
        %p222 = pneg %p104
        %p223 = pneg %p101
        %p224 = pneg %p125
        %p225 = pneg %p122
        %p226 = pneg %p151
        %p227 = pneg %p148
        %s228 = sand.u32 %s138, 1
        %s229 = scalar_lea.sflag [#allocation4], %s228
        %s230 = sand.u32 %s138, 1
        %s231 = scalar_lea.vmem [#allocation5], %s230
        %p232 = scmp.lt.s32.totalorder %s20, 1
        %s233 = scalar_select %p232, %s20, 1
        %s234 = smul.addr %s233, 2
        %s235 = smul.addr %s234, 8
        %s236 = scalar_lea.vmem %s0, %s235
        %v237 = vld [vmem:[%s236] sm:$0xff]
        %v238 = vld [vmem:[%s236 + $0x8] sm:$0xff]
        %v239 = vld [vmem:[#allocation2] sm:$0xff]
        %v240 = vld [vmem:[#allocation2 + $0x8] sm:$0xff]
        %v241 = vld [vmem:[#allocation2 + $0x10] sm:$0xff]
        %v242 = vld [vmem:[#allocation2 + $0x18] sm:$0xff]
        %v243 = vld [vmem:[#allocation2 + $0x20] sm:$0xff]
        %v244 = vld [vmem:[#allocation2 + $0x28] sm:$0xff]
        %v245 = vld [vmem:[#allocation2 + $0x30] sm:$0xff]
        %v246 = vld [vmem:[#allocation2 + $0x38] sm:$0xff]
        %v247 = vld [vmem:[#allocation2 + $0x40] sm:$0xff]
        %v248 = vld [vmem:[#allocation2 + $0x48] sm:$0xff]
        %v249 = vld [vmem:[#allocation2 + $0x50] sm:$0xff]
        %v250 = vld [vmem:[#allocation2 + $0x58] sm:$0xff]
        %v251 = vld [vmem:[#allocation2 + $0x60] sm:$0xff]
        %v252 = vld [vmem:[#allocation2 + $0x68] sm:$0xff]
        %v253 = vld [vmem:[#allocation2 + $0x70] sm:$0xff]
        %v254 = vld [vmem:[#allocation2 + $0x78] sm:$0xff]
        %v255 = vld [vmem:[#allocation2 + $0x80] sm:$0xff]
        %v256 = vld [vmem:[#allocation2 + $0x88] sm:$0xff]
        %v257 = vld [vmem:[#allocation2 + $0x90] sm:$0xff]
        %v258 = vld [vmem:[#allocation2 + $0x98] sm:$0xff]
        %v259 = vld [vmem:[#allocation2 + $0xa0] sm:$0xff]
        %v260 = vld [vmem:[#allocation2 + $0xa8] sm:$0xff]
        %v261 = vld [vmem:[#allocation2 + $0xb0] sm:$0xff]
        %v262 = vld [vmem:[#allocation2 + $0xb8] sm:$0xff]
        %v263 = vld [vmem:[#allocation2 + $0xc0] sm:$0xff]
        %v264 = vld [vmem:[#allocation2 + $0xc8] sm:$0xff]
        %v265 = vld [vmem:[#allocation2 + $0xd0] sm:$0xff]
        %v266 = vld [vmem:[#allocation2 + $0xd8] sm:$0xff]
        %v267 = vld [vmem:[#allocation2 + $0xe0] sm:$0xff]
        %v268 = vld [vmem:[#allocation2 + $0xe8] sm:$0xff]
        %v269 = vld [vmem:[#allocation2 + $0xf0] sm:$0xff]
        %v270 = vld [vmem:[#allocation2 + $0xf8] sm:$0xff]
        %v271 = vld [vmem:[%s2] sm:$0x1]
        %v273 = vlaneseq
        %v274 = vshrl.u32 %v273, 7
        %v275 = vsub.s32 0, %v274
        %v276 = vrot.slane %v271, %v275
        %278 = vmatprep.subr.mxu0 0.0
        %279 = vmatpush1.msra.mxu0 %v239
        %280 = vmatprep.subr.mxu0 0.0
        %281 = vmatpush1.msra.mxu0 %v240
        %282 = vmatprep.subr.mxu0 0.0
        %283 = vmatpush1.msra.mxu0 %v241
        %284 = vmatprep.subr.mxu0 0.0
        %285 = vmatpush1.msra.mxu0 %v242
        %286 = vmatprep.subr.mxu0 0.0
        %287 = vmatpush1.msra.mxu0 %v243
        %288 = vmatprep.subr.mxu0 0.0
        %289 = vmatpush1.msra.mxu0 %v244
        %290 = vmatprep.subr.mxu0 0.0
        %291 = vmatpush1.msra.mxu0 %v245
        %292 = vmatprep.subr.mxu0 0.0
        %293 = vmatpush1.msra.mxu0 %v246
        %294 = vmatprep.subr.mxu0 0.0
        %295 = vmatpush1.msra.mxu0 %v247
        %296 = vmatprep.subr.mxu0 0.0
        %297 = vmatpush1.msra.mxu0 %v248
        %298 = vmatprep.subr.mxu0 0.0
        %299 = vmatpush1.msra.mxu0 %v249
        %300 = vmatprep.subr.mxu0 0.0
        %301 = vmatpush1.msra.mxu0 %v250
        %302 = vmatprep.subr.mxu0 0.0
        %303 = vmatpush1.msra.mxu0 %v251
        %304 = vmatprep.subr.mxu0 0.0
        %305 = vmatpush1.msra.mxu0 %v252
        %306 = vmatprep.subr.mxu0 0.0
        %307 = vmatpush1.msra.mxu0 %v253
        %308 = vmatprep.subr.mxu0 0.0
        %309 = vmatpush1.msra.mxu0 %v254
        %310 = vmatprep.subr.mxu0 0.0
        %311 = vmatpush1.msra.mxu0 %v255
        %312 = vmatprep.subr.mxu0 0.0
        %313 = vmatpush1.msra.mxu0 %v256
        %314 = vmatprep.subr.mxu0 0.0
        %315 = vmatpush1.msra.mxu0 %v257
        %316 = vmatprep.subr.mxu0 0.0
        %317 = vmatpush1.msra.mxu0 %v258
        %318 = vmatprep.subr.mxu0 0.0
        %319 = vmatpush1.msra.mxu0 %v259
        %320 = vmatprep.subr.mxu0 0.0
        %321 = vmatpush1.msra.mxu0 %v260
        %322 = vmatprep.subr.mxu0 0.0
        %323 = vmatpush1.msra.mxu0 %v261
        %324 = vmatprep.subr.mxu0 0.0
        %325 = vmatpush1.msra.mxu0 %v262
        %326 = vmatprep.subr.mxu0 0.0
        %327 = vmatpush1.msra.mxu0 %v263
        %328 = vmatprep.subr.mxu0 0.0
        %329 = vmatpush1.msra.mxu0 %v264
        %330 = vmatprep.subr.mxu0 0.0
        %331 = vmatpush1.msra.mxu0 %v265
        %332 = vmatprep.subr.mxu0 0.0
        %333 = vmatpush1.msra.mxu0 %v266
        %334 = vmatprep.subr.mxu0 0.0
        %335 = vmatpush1.msra.mxu0 %v267
        %336 = vmatprep.subr.mxu0 0.0
        %337 = vmatpush1.msra.mxu0 %v268
        %338 = vmatprep.subr.mxu0 0.0
        %339 = vmatpush1.msra.mxu0 %v269
        %340 = vmatprep.subr.mxu0 0.0
        %341 = vmatpush1.msra.mxu0 %v270
        %342 = vmatprep.mubr.f32.mxu0 %v238
        %343 = vmatmul.mubr.f32.gmra.mrb[0].mxu0 %v237
        %v344 = vpop.f32.mrb[0].mxu0
        %v345 = vadd.f32 %v276, %v344
        %v346 = vpop.f32.mrb[0].mxu0
        %347 = vdwg.mxu0
        %v348 = vmax.f32 %v345, 0.0
        %v349 = vld [vmem:[%s3] sm:$0xff]
        %v350 = vld [vmem:[%s3 + $0x8] sm:$0xff]
        %v351 = vld [vmem:[%s3 + $0x10] sm:$0xff]
        %v352 = vld [vmem:[%s3 + $0x18] sm:$0xff]
        %v353 = vld [vmem:[%s3 + $0x20] sm:$0xff]
        %v354 = vld [vmem:[%s3 + $0x28] sm:$0xff]
        %v355 = vld [vmem:[%s3 + $0x30] sm:$0xff]
        %v356 = vld [vmem:[%s3 + $0x38] sm:$0xff]
        %v357 = vld [vmem:[%s3 + $0x40] sm:$0xff]
        %v358 = vld [vmem:[%s3 + $0x48] sm:$0xff]
        %v359 = vld [vmem:[%s3 + $0x50] sm:$0xff]
        %v360 = vld [vmem:[%s3 + $0x58] sm:$0xff]
        %v361 = vld [vmem:[%s3 + $0x60] sm:$0xff]
        %v362 = vld [vmem:[%s3 + $0x68] sm:$0xff]
        %v363 = vld [vmem:[%s3 + $0x70] sm:$0xff]
        %v364 = vld [vmem:[%s3 + $0x78] sm:$0xff]
        %v365 = vld [vmem:[%s4] sm:$0x1]
        %v367 = vlaneseq
        %v368 = vshrl.u32 %v367, 7
        %v369 = vsub.s32 0, %v368
        %v370 = vrot.slane %v365, %v369
        %372 = vmatprep.subr.mxu0 0.0
        %373 = vmatpush1.msra.mxu0 %v349
        %374 = vmatprep.subr.mxu0 0.0
        %375 = vmatpush1.msra.mxu0 %v350
        %376 = vmatprep.subr.mxu0 0.0
        %377 = vmatpush1.msra.mxu0 %v351
        %378 = vmatprep.subr.mxu0 0.0
        %379 = vmatpush1.msra.mxu0 %v352
        %380 = vmatprep.subr.mxu0 0.0
        %381 = vmatpush1.msra.mxu0 %v353
        %382 = vmatprep.subr.mxu0 0.0
        %383 = vmatpush1.msra.mxu0 %v354
        %384 = vmatprep.subr.mxu0 0.0
        %385 = vmatpush1.msra.mxu0 %v355
        %386 = vmatprep.subr.mxu0 0.0
        %387 = vmatpush1.msra.mxu0 %v356
        %388 = vmatprep.subr.mxu0 0.0
        %389 = vmatpush1.msra.mxu0 %v357
        %390 = vmatprep.subr.mxu0 0.0
        %391 = vmatpush1.msra.mxu0 %v358
        %392 = vmatprep.subr.mxu0 0.0
        %393 = vmatpush1.msra.mxu0 %v359
        %394 = vmatprep.subr.mxu0 0.0
        %395 = vmatpush1.msra.mxu0 %v360
        %396 = vmatprep.subr.mxu0 0.0
        %397 = vmatpush1.msra.mxu0 %v361
        %398 = vmatprep.subr.mxu0 0.0
        %399 = vmatpush1.msra.mxu0 %v362
        %400 = vmatprep.subr.mxu0 0.0
        %401 = vmatpush1.msra.mxu0 %v363
        %402 = vmatprep.subr.mxu0 0.0
        %403 = vmatpush1.msra.mxu0 %v364
        %404 = vmatprep.subr.mxu0 0.0
        %405 = vmatpush1.msra.mxu0 0.0
        %406 = vmatprep.subr.mxu0 0.0
        %407 = vmatpush1.msra.mxu0 0.0
        %408 = vmatprep.subr.mxu0 0.0
        %409 = vmatpush1.msra.mxu0 0.0
        %410 = vmatprep.subr.mxu0 0.0
        %411 = vmatpush1.msra.mxu0 0.0
        %412 = vmatprep.subr.mxu0 0.0
        %413 = vmatpush1.msra.mxu0 0.0
        %414 = vmatprep.subr.mxu0 0.0
        %415 = vmatpush1.msra.mxu0 0.0
        %416 = vmatprep.subr.mxu0 0.0
        %417 = vmatpush1.msra.mxu0 0.0
        %418 = vmatprep.subr.mxu0 0.0
        %419 = vmatpush1.msra.mxu0 0.0
        %420 = vmatprep.subr.mxu0 0.0
        %421 = vmatpush1.msra.mxu0 0.0
        %422 = vmatprep.subr.mxu0 0.0
        %423 = vmatpush1.msra.mxu0 0.0
        %424 = vmatprep.subr.mxu0 0.0
        %425 = vmatpush1.msra.mxu0 0.0
        %426 = vmatprep.subr.mxu0 0.0
        %427 = vmatpush1.msra.mxu0 0.0
        %428 = vmatprep.subr.mxu0 0.0
        %429 = vmatpush1.msra.mxu0 0.0
        %430 = vmatprep.subr.mxu0 0.0
        %431 = vmatpush1.msra.mxu0 0.0
        %432 = vmatprep.subr.mxu0 0.0
        %433 = vmatpush1.msra.mxu0 0.0
        %434 = vmatprep.subr.mxu0 0.0
        %435 = vmatpush1.msra.mxu0 0.0
        %436 = vmatprep.mubr.f32.mxu0 0.0
        %437 = vmatmul.mubr.f32.gmra.mrb[0].mxu0 %v348
        %v438 = vpop.f32.mrb[0].mxu0
        %v439 = vadd.f32 %v370, %v438
        %v440 = vpop.f32.mrb[0].mxu0
        %441 = vdwg.mxu0
        %v442 = vmul.f32 %v439, %v439
        %vm443 = vcmask 523264
        %v444 = vsel %vm443, %v442, 0.0
        %445 = vadd.xlane.f32.xlu0 %v444
        %v446 = vpop.xlane.xlu0 %445
        %v447 = vadd.f32 %v446, 1.0
        %v448 = vrcp.pop %v447
        %v450 = vlaneseq
        %v451 = vand.u32 %v450, 127
        %v452 = vlaneseq
        %v453 = vshrl.u32 %v452, 7
        %v454 = vsub.s32 %v451, %v453
        %v455 = vrot.slane %v448, %v454
        %vm457 = vcmask 57344
        %458 = vst.msk [vmem:[%s231] sm:$0x1] %vm457, %v455
        %s459 = sand.u32 %s138, 1
        %s460 = scalar_lea.sflag [#allocation4], %s459
        %s461 = sand.u32 %s138, 1
        %s462 = scalar_lea.vmem [#allocation5], %s461
        // Predicated region
        $region45: #{tpu_custom_call.1} parent=39 // pred_check
          %p463 = pneg %p148
        $region46: #{tpu_custom_call.1} parent=39 // pred_check_branch
          %465 = sbr.rel (%p463) target = $region48
        $region47: #{tpu_custom_call.1} parent=39 // pred_region
          %s467 = ssub.s32 16, 16
          %468 = vsyncadd %s460, %s467
          %s469 = smul.addr %s20, 16
          %s470 = scalar_lea.hbm %s5, %s469
          %s472 = sshll.u32 %s462, 4
          %s473 = int_to_ptr.vmem [resolvable:$true] %s472
          %475 = dma.vmem_to_hbm [thread:$0]  %s473, 16, %s470, %s460
        $region48: #{tpu_custom_call.1} parent=39 // pred_fallthru
          _
      $region40: #{tpu_custom_call.1} parent=5 // pred_fallthru
        _
      %p476 = scmp.le.s32.totalorder 2, %s15
      // Predicated region
      $region49: #{tpu_custom_call.1} parent=5 // pred_check
        %p477 = pneg %p476
      $region50: #{tpu_custom_call.1} parent=5 // pred_check_branch
        %479 = sbr.rel (%p477) target = $region52
      $region51: #{tpu_custom_call.1} parent=5 // pred_region
        %s480 = ssub.s32 %s15, 2
        // Predicated region
        $region53: #{tpu_custom_call.1} parent=51 // pred_check
          %p481 = pneg %p154
        $region54: #{tpu_custom_call.1} parent=51 // pred_check_branch
          %483 = sbr.rel (%p481) target = $region56
        $region55: #{tpu_custom_call.1} parent=51 // pred_region
          %s484 = sand.u32 %s139, 1
          %s485 = scalar_lea.sflag [#allocation4], %s484
          %s486 = sand.u32 %s139, 1
          %s487 = scalar_lea.vmem [#allocation5], %s486
          %488 = dma.done %s485, 16
        $region56: #{tpu_custom_call.1} parent=51 // pred_fallthru
          _
      $region52: #{tpu_custom_call.1} parent=5 // pred_fallthru
        _
    $region6: #{tpu_custom_call.1} parent=1 // loop_footer
      %s19 = sadd.s32 1, %s15
    $region7: #{tpu_custom_call.1} parent=1 // loop_footer_branch
      %14 = sbr.rel target = $region3
    $region8: #{tpu_custom_call.1} parent=1 // loop_exit
      _
    %489 = vsyncpa [#allocation3], 1
    %s490 = scalar_lea.sflag [#allocation3], 1
    %491 = vsyncpa %s490, 1
    %492 = vsyncpa [#allocation4], 1
    %s493 = scalar_lea.sflag [#allocation4], 1
    %494 = vsyncpa %s493, 1

</llo_original>
